<compile_context>
chip_gen: v6e
topology: v6e:2x2x1
jax: 0.10.0
libtpu: 0.0.40
codegen_flags: <defaults>
</compile_context>

<pallas_src>
import jax
import jax.numpy as jnp
from jax.experimental import pallas as pl
from jax.experimental.pallas import tpu as pltpu


def _scale_rows_kernel(scale_ref, x_ref, o_ref):
    # scale_ref: (1, tile_n) f32 slice of the pre-broadcast scale row.
    # x_ref / o_ref: (tile_m, tile_n) blocks of the flattened input / output.
    # Compute in f32 (matches PyTorch's fp32-parameter promotion), cast product.
    o_ref[...] = (x_ref[...].astype(jnp.float32) * scale_ref[...]).astype(o_ref.dtype)


def _pick_tiles(M, N, itemsize, target_block_bytes):
    """Choose (tile_m, tile_n) obeying the (8,128) rule and a VMEM budget.

    tile_m is rounded to the dtype's native sublane packing so sub-32-bit
    inputs keep full vregs and unmasked stores.
    """
    sublane = max(8, 32 // itemsize)  # 8 for f32, 16 for bf16, 32 for int8/fp8

    # Column tile: prefer full rows (lane-dense) if `sublane` full rows fit the
    # budget; otherwise the largest multiple of 128 keeping a sublane-row block
    # in budget.
    if N <= 128 or sublane * N * itemsize <= target_block_bytes:
        tile_n = N
    else:
        tile_n = max(128, (target_block_bytes // (sublane * itemsize) // 128) * 128)
        tile_n = min(tile_n, (N // 128) * 128)

    # Row tile: largest multiple of `sublane` within budget, or all rows.
    rows = max(1, target_block_bytes // (tile_n * itemsize))
    if M <= sublane or M <= rows:
        tile_m = M
    else:
        tile_m = max(sublane, (rows // sublane) * sublane)
    return tile_m, tile_n, sublane


def _maybe_split_for_megacore(M, N, tile_m, tile_n, sublane, itemsize):
    """Ensure >= 2 grid blocks for non-trivial arrays so v7x's 2 TCs both stream."""
    total_bytes = M * N * itemsize
    if total_bytes < (1 << 20):  # tiny: per-step overhead would dominate
        return tile_m, tile_n
    if pl.cdiv(M, tile_m) * pl.cdiv(N, tile_n) >= 2:
        return tile_m, tile_n
    if M >= 2 * sublane:
        half = pl.cdiv(M, 2)
        tile_m = max(sublane, (half // sublane) * sublane)
    elif N >= 256:
        tile_n = max(128, ((N // 2) // 128) * 128)
    return tile_m, tile_n


def virtual_att_operation(x, pruning_vector, *, target_block_bytes=None):
    """x: (B, H, D, W) array; pruning_vector: (D,) array."""
    assert x.ndim == 4, "virtual_att_operation.forward only handles 4D input"
    B, H, D, W = x.shape
    assert pruning_vector.shape == (D,)

    M, N = B * H, D * W
    itemsize = jnp.dtype(x.dtype).itemsize

    # Generation-aware sizing: bigger blocks shrink the relative cost of the
    # ~0.35us/step pipeline overhead (matters most on v7x's fast HBM), while
    # staying well under the per-generation VMEM capacity.
    try:
        vmem_cap = int(pltpu.get_tpu_info().vmem_capacity_bytes)
    except Exception:  # pragma: no cover - conservative fallback
        vmem_cap = 64 * 1024 * 1024
    if target_block_bytes is None:
        target_block_bytes = int(max(2 << 20, min(8 << 20, vmem_cap // 12)))

    # Pre-broadcast the pruning vector along W, kept in f32:
    #   scale_row[0, d*W + w] = vec[d]
    # TODO(synk): PyTorch would promote the output to f32 when x is bf16/fp8;
    # here the f32 product is cast back to x.dtype to keep the pipeline dtype.
    scale_row = jnp.repeat(pruning_vector.astype(jnp.float32), W).reshape(1, N)
    x2d = x.reshape(M, N)

    tile_m, tile_n, sublane = _pick_tiles(M, N, itemsize, target_block_bytes)
    tile_m, tile_n = _maybe_split_for_megacore(M, N, tile_m, tile_n, sublane, itemsize)

    grid_m = pl.cdiv(M, tile_m)
    grid_n = pl.cdiv(N, tile_n)

    block_bytes = tile_m * tile_n * itemsize
    # in + out double-buffered ~= 4x block (+ small scale row); keep >=32 MiB
    # so we're past every generation's scoped default, capped at 3/4 of the
    # physical VMEM (48 MiB on v7x, 96 MiB on v5e/v6e).
    vmem_limit = int(min(max(32 << 20, 6 * block_bytes), (vmem_cap * 3) // 4))

    # Grid order (grid_n, grid_m): the inner (fastest) axis is the ROW axis, so
    # the scale block index (0, j) is constant over consecutive steps and its
    # DMA is skipped — the scale row costs ~one fetch per column group total.
    out2d = pl.pallas_call(
        _scale_rows_kernel,
        out_shape=jax.ShapeDtypeStruct((M, N), x.dtype),
        grid_spec=pltpu.PrefetchScalarGridSpec(
            num_scalar_prefetch=0,
            grid=(grid_n, grid_m),
            in_specs=[
                # (1, tile_n) f32 slice of the scale row; invariant on inner axis.
                pl.BlockSpec((1, tile_n), lambda j, i: (0, j)),
                # (tile_m, tile_n) slab of the flattened input.
                pl.BlockSpec((tile_m, tile_n), lambda j, i: (i, j)),
            ],
            out_specs=pl.BlockSpec((tile_m, tile_n), lambda j, i: (i, j)),
        ),
        compiler_params=pltpu.CompilerParams(
            dimension_semantics=("parallel", "parallel"),
            vmem_limit_bytes=vmem_limit,
        ),
        cost_estimate=pl.CostEstimate(
            flops=M * N,
            transcendentals=0,
            bytes_accessed=2 * M * N * itemsize + N * 4,
        ),
    )(scale_row, x2d)

    return out2d.reshape(B, H, D, W)


if __name__ == "__main__":
    key = jax.random.PRNGKey(0)
    k_x, k_v = jax.random.split(key)

    # Small shapes consistent with an attention-score tensor:
    # batch=2, num_heads=4, dim=16 (pruned axis), width=16.
    B, H, D, W = 2, 4, 16, 16
    x = jax.random.normal(k_x, (B, H, D, W), dtype=jnp.float32)

    # Deterministic pruning vector (module default is ones; use a random
    # deterministic vector so the multiply is non-trivial).
    pruning_vector = jax.random.uniform(k_v, (D,), dtype=jnp.float32)

    out = virtual_att_operation(x, pruning_vector)
    out = jax.block_until_ready(out)

    # Reference check against plain-JAX broadcast semantics of the PyTorch op.
    ref = pruning_vector[None, None, :, None] * x
    assert out.shape == ref.shape
    assert out.dtype == x.dtype
    assert jnp.allclose(out, ref, atol=1e-6), "mismatch vs reference"

    print("KERNEL_OK")
</pallas_src>

<mosaic_0001>
module attributes {stable_mosaic.version = 11 : i64} {
  func.func @_scale_rows_kernel(%arg0: i32, %arg1: i32, %arg2: memref<1x256xf32, #tpu.memory_space<vmem>>, %arg3: memref<8x256xf32, #tpu.memory_space<vmem>>, %arg4: memref<8x256xf32, #tpu.memory_space<vmem>>) attributes {dimension_semantics = [#tpu.dimension_semantics<parallel>, #tpu.dimension_semantics<parallel>], iteration_bounds = array<i64: 1, 1>, scalar_prefetch = 0 : i64, scratch_operands = 0 : i64, tpu.core_type = #tpu.core_type<tc>, window_params = [{transform_indices = @transform_0, window_bounds = array<i64: 1, 256>}, {transform_indices = @transform_1, window_bounds = array<i64: 8, 256>}, {transform_indices = @transform_2, window_bounds = array<i64: 8, 256>}]} {
    %c0 = arith.constant 0 : index
    %c0_0 = arith.constant 0 : index
    %0 = vector.load %arg3[%c0, %c0_0] : memref<8x256xf32, #tpu.memory_space<vmem>>, vector<8x256xf32>
    %c0_1 = arith.constant 0 : index
    %c0_2 = arith.constant 0 : index
    %1 = vector.load %arg2[%c0_1, %c0_2] : memref<1x256xf32, #tpu.memory_space<vmem>>, vector<1x256xf32>
    %2 = vector.broadcast %1 : vector<1x256xf32> to vector<8x256xf32>
    %3 = arith.mulf %0, %2 : vector<8x256xf32>
    %c0_3 = arith.constant 0 : index
    %c0_4 = arith.constant 0 : index
    %4 = vector.load %arg4[%c0_3, %c0_4] : memref<8x256xf32, #tpu.memory_space<vmem>>, vector<8x256xf32>
    tpu.vector_store %arg4[%c0_3, %c0_4], %3 {strides = array<i32>} : memref<8x256xf32, #tpu.memory_space<vmem>>, vector<8x256xf32>,
    return
  }
  func.func @transform_0(%arg0: i32, %arg1: i32) -> (i32, i32) {
    %c0_i32 = arith.constant 0 : i32
    %c0_i32_0 = arith.constant 0 : i32
    return %c0_i32, %arg0 : i32, i32
  }
  func.func @transform_1(%arg0: i32, %arg1: i32) -> (i32, i32) {
    %c0_i32 = arith.constant 0 : i32
    return %arg1, %arg0 : i32, i32
  }
  func.func @transform_2(%arg0: i32, %arg1: i32) -> (i32, i32) {
    %c0_i32 = arith.constant 0 : i32
    return %arg1, %arg0 : i32, i32
  }
}

</mosaic_0001>

<llo_original>
// kernel: tpu_custom_call.1
$region0: #{tpu_custom_call.1}
  #allocation0 [shape = 'u32[]', space=smem, size = 0x4, offset = 0x4, fixed_abs, tag = 'smem constant byte address 0x4 - core index']
  #allocation1 [shape = 'u32[144,128]{1,0:T(1,128)}', space=vmem, size = 0x12000, scoped, tag = 'internal scratch']
  %s0 = inlined_call_operand.hbm [shape: f32[1,256], index: 0, kind: input, shape index: {}]
  %s1 = inlined_call_operand.hbm [shape: f32[8,256], index: 1, kind: input, shape index: {}]
  %s2 = inlined_call_operand.hbm [shape: f32[8,256], index: 2, kind: output, shape index: {}]
  %s3 = sld [smem:[#allocation0]]
  $region26: #{tpu_custom_call.1} parent=0
    _
  %s5 = ssub.s32 1, %s3
  %s6 = scalar_select 0, %s5, %s3
  $region1: #{tpu_custom_call.1} parent=0
    #allocation2 [shape = 'u8[1024]{0}', space=vmem, size = 0x400, scoped, tag = 'input window, operand 0, single buffered']
    #allocation3 [shape = 's32[1]{0}', space=sflag, size = 0x4, scoped, tag = 'scoped memory for tpu_custom_call.1']
    #allocation4 [shape = 's32[1]{0}', space=sflag, size = 0x4, scoped, tag = 'scoped memory for tpu_custom_call.1']
    #allocation5 [shape = 'u8[8192]{0}', space=vmem, size = 0x2000, scoped, tag = 'input window, operand 1, single buffered']
    #allocation6 [shape = 's32[1]{0}', space=sflag, size = 0x4, scoped, tag = 'scoped memory for tpu_custom_call.1']
    #allocation7 [shape = 'u8[8192]{0}', space=vmem, size = 0x2000, scoped, tag = 'output window, operand 0, single buffered']
    %7 = vsyncpa [#allocation3], 0
    %8 = vsyncpa [#allocation6], 0
    %9 = vsyncpa [#allocation4], 0
    // Predicated region
    $region2: #{tpu_custom_call.1} parent=1 // pred_check
      _
    $region3: #{tpu_custom_call.1} parent=1 // pred_check_branch
      %11 = sbr.rel (0) target = $region5
    $region4: #{tpu_custom_call.1} parent=1 // pred_region
      %s13 = ssub.s32 32, 32
      %14 = vsyncadd [#allocation3], %s13
      %s16 = sshll.u32 [#allocation2], 4
      %s17 = int_to_ptr.vmem [resolvable:$true] %s16
      %19 = dma.hbm_to_vmem [thread:$0]  %s0, 32, %s17, [#allocation3]
    $region5: #{tpu_custom_call.1} parent=1 // pred_fallthru
      _
    // Predicated region
    $region6: #{tpu_custom_call.1} parent=1 // pred_check
      _
    $region7: #{tpu_custom_call.1} parent=1 // pred_check_branch
      %21 = sbr.rel (0) target = $region9
    $region8: #{tpu_custom_call.1} parent=1 // pred_region
      %s23 = ssub.s32 256, 256
      %24 = vsyncadd [#allocation6], %s23
      %s26 = sshll.u32 [#allocation5], 4
      %s27 = int_to_ptr.vmem [resolvable:$true] %s26
      %29 = dma.hbm_to_vmem [thread:$0]  %s1, 256, %s27, [#allocation6]
    $region9: #{tpu_custom_call.1} parent=1 // pred_fallthru
      _
    // Predicated region
    $region10: #{tpu_custom_call.1} parent=1 // pred_check
      _
    $region11: #{tpu_custom_call.1} parent=1 // pred_check_branch
      %31 = sbr.rel (0) target = $region13
    $region12: #{tpu_custom_call.1} parent=1 // pred_region
      %32 = dma.done [#allocation3], 32
    $region13: #{tpu_custom_call.1} parent=1 // pred_fallthru
      _
    // Predicated region
    $region14: #{tpu_custom_call.1} parent=1 // pred_check
      _
    $region15: #{tpu_custom_call.1} parent=1 // pred_check_branch
      %34 = sbr.rel (0) target = $region17
    $region16: #{tpu_custom_call.1} parent=1 // pred_region
      %35 = dma.done [#allocation6], 256
    $region17: #{tpu_custom_call.1} parent=1 // pred_fallthru
      _
    %v36 = vld [vmem:[#allocation5] sm:$0xff]
    %v37 = vld [vmem:[#allocation5 + $0x8] sm:$0xff]
    %v38 = vld [vmem:[#allocation2] sm:$0x3]
    %v40 = vlaneseq
    %v41 = vshrl.u32 %v40, 7
    %v42 = vsub.s32 0, %v41
    %v43 = vrot.slane %v38, %v42
    %v44 = vlaneseq
    %v45 = vshrl.u32 %v44, 7
    %v46 = vsub.s32 1, %v45
    %v47 = vrot.slane %v38, %v46
    %v50 = vmul.f32 %v36, %v43
    %v51 = vmul.f32 %v37, %v47
    %52 = vst [vmem:[#allocation7] sm:$0xff] %v50
    %53 = vst [vmem:[#allocation7 + $0x8] sm:$0xff] %v51
    // Predicated region
    $region18: #{tpu_custom_call.1} parent=1 // pred_check
      _
    $region19: #{tpu_custom_call.1} parent=1 // pred_check_branch
      %55 = sbr.rel (0) target = $region21
    $region20: #{tpu_custom_call.1} parent=1 // pred_region
      %s57 = ssub.s32 256, 256
      %58 = vsyncadd [#allocation4], %s57
      %s60 = sshll.u32 [#allocation7], 4
      %s61 = int_to_ptr.vmem [resolvable:$true] %s60
      %63 = dma.vmem_to_hbm [thread:$0]  %s61, 256, %s2, [#allocation4]
    $region21: #{tpu_custom_call.1} parent=1 // pred_fallthru
      _
    // Predicated region
    $region22: #{tpu_custom_call.1} parent=1 // pred_check
      _
    $region23: #{tpu_custom_call.1} parent=1 // pred_check_branch
      %65 = sbr.rel (0) target = $region25
    $region24: #{tpu_custom_call.1} parent=1 // pred_region
      %66 = dma.done [#allocation4], 256
    $region25: #{tpu_custom_call.1} parent=1 // pred_fallthru
      _
    %67 = vsyncpa [#allocation3], 1
    %68 = vsyncpa [#allocation6], 1
    %69 = vsyncpa [#allocation4], 1

</llo_original>
